<compile_context>
chip_gen: v7x
topology: tpu7x:2x2x1
jax: 0.10.0
libtpu: 0.0.40
codegen_flags: <defaults>
</compile_context>

<pallas_src>
import functools

import jax
import jax.numpy as jnp
from jax.experimental import pallas as pl
from jax.experimental.pallas import tpu as pltpu


def _action_selector_kernel(q_ref, o_ref, *, soft_maxpool: bool, temperature: float):
    # q_ref block: (tb, C, HW); o_ref block: (tb, HW)
    if soft_maxpool:
        # f32 math for exp (v5e has no bf16 VPU/EUP; keeps numerics stable).
        s = q_ref[...].astype(jnp.float32) * jnp.float32(temperature)
        m = jnp.max(s, axis=1, keepdims=True)          # sublane reduction over C
        e = jnp.exp(s - m)
        num = jnp.sum(e * s, axis=1)                   # (tb, HW)
        den = jnp.sum(e, axis=1)                       # (tb, HW)
        o_ref[...] = (num / den).astype(o_ref.dtype)   # exact divide (free accuracy)
    else:
        # max/compare needs no f32 accumulation; stay in the input dtype.
        o_ref[...] = jnp.max(q_ref[...], axis=1).astype(o_ref.dtype)


def action_selector(q_values, *, soft_maxpool: bool = False, temperature: float = 1.0,
                    min_pallas_bytes: int = 256 * 1024):
    """Pallas equivalent of ActionSelector.forward.

    q_values: [B, C, H, W]  ->  returns [B, 1, H, W]
    """
    B, C, H, W = q_values.shape
    HW = H * W
    itemsize = jnp.dtype(q_values.dtype).itemsize
    total_in_bytes = B * C * HW * itemsize

    # Small-size fallback: for tiny inputs the custom-call launch + DMA setup
    # dominate and XLA fuses this trivially.
    if total_in_bytes < min_pallas_bytes:
        if soft_maxpool:
            s = q_values * temperature
            return jnp.sum(jax.nn.softmax(s, axis=1) * s, axis=1, keepdims=True)
        return jnp.max(q_values, axis=1, keepdims=True)

    # Lane-dense layout: flatten spatial dims into the last axis (free reshape).
    q_flat = q_values.reshape(B, C, HW)

    # ---- VMEM budgeting -----------------------------------------------------
    try:
        vmem_cap = int(pltpu.get_tpu_info().vmem_capacity_bytes)
    except Exception:
        vmem_cap = 64 * 1024 * 1024  # v7x-safe fallback
    # ~1/16 of VMEM for one input tile: 4 MiB on v7x (64 MiB VMEM), 8 MiB on
    # v5e/v6e (128 MiB).  Tiles beyond a few MiB are already at HBM roofline.
    tile_budget = max(2 * 1024 * 1024, vmem_cap // 16)
    # Soft path materializes whole-tile f32 temporaries (s, e, e*s): count
    # ~3 extra f32 per element on top of the (double-buffered) input element.
    eff_elem_bytes = itemsize + (12 if soft_maxpool else 0)
    bytes_per_batch_row = C * HW * eff_elem_bytes
    max_tb = max(1, tile_budget // bytes_per_batch_row)

    # Keep >= ~4 grid steps when B allows (DMA/compute overlap + v7x's 2 TCs).
    target_tb = min(max_tb, max(1, pl.cdiv(B, 4)))
    # The 2D output block (tb, HW) needs tb % 8 == 0 or tb == B (sublane rule).
    if target_tb >= B:
        tb = B
    elif target_tb >= 8:
        tb = (target_tb // 8) * 8
    elif B <= 8:
        tb = B                 # tiny batch: single step is fine
    else:
        tb = 8                 # minimum legal multi-step tile; budget is conservative
    grid = (pl.cdiv(B, tb),)   # partial last tile OK: reduction is per-row over C,
                               # out-of-range output rows are masked on writeback.

    kernel = functools.partial(
        _action_selector_kernel,
        soft_maxpool=soft_maxpool,
        temperature=float(temperature),
    )

    cost = pl.CostEstimate(
        flops=(6 if soft_maxpool else 1) * B * C * HW,
        transcendentals=(B * C * HW) if soft_maxpool else 0,
        bytes_accessed=total_in_bytes + B * HW * itemsize,
    )

    out_flat = pl.pallas_call(
        kernel,
        out_shape=jax.ShapeDtypeStruct((B, HW), q_values.dtype),
        grid=grid,
        in_specs=[pl.BlockSpec((tb, C, HW), lambda b: (b, 0, 0))],
        out_specs=pl.BlockSpec((tb, HW), lambda b: (b, 0)),
        compiler_params=pltpu.CompilerParams(
            # Batch-tile axis is independent -> shards across v7x's 2 TCs when
            # the grid has >= 2 steps; harmless no-op on v5e/v6e.
            dimension_semantics=("parallel",),
            vmem_limit_bytes=min(vmem_cap // 2, 64 * 1024 * 1024),
        ),
        cost_estimate=cost,
    )(q_flat)

    return out_flat.reshape(B, 1, H, W)


def _reference(q_values, *, soft_maxpool: bool, temperature: float):
    if soft_maxpool:
        s = q_values * temperature
        softmaxed = jax.nn.softmax(s, axis=1)
        return jnp.sum(softmaxed * s, axis=1, keepdims=True)
    return jnp.max(q_values, axis=1, keepdims=True)


if __name__ == "__main__":
    key = jax.random.PRNGKey(0)
    # small shapes consistent with the module: batch=2, num_actions(channels)=4, 16x16 grid
    B, C, H, W = 2, 4, 16, 16
    q = jax.random.normal(key, (B, C, H, W), dtype=jnp.float32)

    # Force the Pallas path (min_pallas_bytes=0) so the kernel itself is exercised.
    # hard max-pool path (default ActionSelector config) — exact.
    out_hard = jax.block_until_ready(
        action_selector(q, soft_maxpool=False, min_pallas_bytes=0))
    ref_hard = _reference(q, soft_maxpool=False, temperature=1.0)
    assert out_hard.shape == (B, 1, H, W)
    assert jnp.allclose(out_hard, ref_hard, atol=1e-5, rtol=1e-5)

    # soft max-pool path — exact division now, so tight tolerance.
    temp = 2.0
    out_soft = jax.block_until_ready(
        action_selector(q, soft_maxpool=True, temperature=temp, min_pallas_bytes=0))
    ref_soft = _reference(q, soft_maxpool=True, temperature=temp)
    assert out_soft.shape == (B, 1, H, W)
    assert jnp.allclose(out_soft, ref_soft, atol=1e-5, rtol=1e-5)

    # Larger batch exercises the multi-step grid (tb=8, 2 steps) on both paths.
    B2 = 16
    q2 = jax.random.normal(jax.random.PRNGKey(1), (B2, C, H, W), dtype=jnp.float32)
    out2_hard = jax.block_until_ready(
        action_selector(q2, soft_maxpool=False, min_pallas_bytes=0))
    assert jnp.allclose(out2_hard, _reference(q2, soft_maxpool=False, temperature=1.0),
                        atol=1e-5, rtol=1e-5)
    out2_soft = jax.block_until_ready(
        action_selector(q2, soft_maxpool=True, temperature=temp, min_pallas_bytes=0))
    assert jnp.allclose(out2_soft, _reference(q2, soft_maxpool=True, temperature=temp),
                        atol=1e-5, rtol=1e-5)

    print("KERNEL_OK")
</pallas_src>

<mosaic_0001>
module attributes {stable_mosaic.version = 11 : i64} {
  func.func @_action_selector_kernel(%arg0: i32, %arg1: memref<2x4x256xf32, #tpu.memory_space<vmem>>, %arg2: memref<2x256xf32, #tpu.memory_space<vmem>>) attributes {dimension_semantics = [#tpu.dimension_semantics<parallel>], iteration_bounds = array<i64: 1>, scalar_prefetch = 0 : i64, scratch_operands = 0 : i64, tpu.core_type = #tpu.core_type<tc>, window_params = [{transform_indices = @transform_0, window_bounds = array<i64: 2, 4, 256>}, {transform_indices = @transform_1, window_bounds = array<i64: 2, 256>}]} {
    %c0 = arith.constant 0 : index
    %c0_0 = arith.constant 0 : index
    %c0_1 = arith.constant 0 : index
    %0 = vector.load %arg1[%c0, %c0_0, %c0_1] : memref<2x4x256xf32, #tpu.memory_space<vmem>>, vector<2x4x256xf32>
    %cst = arith.constant dense<0xFF800000> : vector<2x256xf32>
    %1 = vector.multi_reduction <maximumf>, %0, %cst [1] : vector<2x4x256xf32> to vector<2x256xf32>
    %c0_2 = arith.constant 0 : index
    %c0_3 = arith.constant 0 : index
    %2 = vector.load %arg2[%c0_2, %c0_3] : memref<2x256xf32, #tpu.memory_space<vmem>>, vector<2x256xf32>
    tpu.vector_store %arg2[%c0_2, %c0_3], %1 {strides = array<i32>} : memref<2x256xf32, #tpu.memory_space<vmem>>, vector<2x256xf32>,
    return
  }
  func.func @transform_0(%arg0: i32) -> (i32, i32, i32) {
    %c0_i32 = arith.constant 0 : i32
    %c0_i32_0 = arith.constant 0 : i32
    %c0_i32_1 = arith.constant 0 : i32
    return %arg0, %c0_i32, %c0_i32_0 : i32, i32, i32
  }
  func.func @transform_1(%arg0: i32) -> (i32, i32) {
    %c0_i32 = arith.constant 0 : i32
    %c0_i32_0 = arith.constant 0 : i32
    return %arg0, %c0_i32 : i32, i32
  }
}

</mosaic_0001>

<llo_original>
// kernel: tpu_custom_call.1
$region0: #{tpu_custom_call.1}
  #allocation0 [shape = 'u32[]', space=smem, size = 0x4, offset = 0x4, fixed_abs, tag = 'smem constant byte address 0x4 - core index']
  #allocation1 [shape = 'u32[144,128]{1,0:T(1,128)}', space=vmem, size = 0x12000, scoped, tag = 'internal scratch']
  %s0 = inlined_call_operand.hbm [shape: f32[2,4,256], index: 0, kind: input, shape index: {}]
  %s1 = inlined_call_operand.hbm [shape: f32[2,256], index: 1, kind: output, shape index: {}]
  %s2 = sld [smem:[#allocation0]]
  $region18: #{tpu_custom_call.1} parent=0
    _
  %s4 = ssub.s32 1, %s2
  %s5 = scalar_select 0, %s4, %s2
  $region1: #{tpu_custom_call.1} parent=0
    #allocation2 [shape = 'u8[8192]{0}', space=vmem, size = 0x2000, scoped, tag = 'input window, operand 0, single buffered']
    #allocation3 [shape = 's32[1]{0}', space=sflag, size = 0x4, scoped, tag = 'scoped memory for tpu_custom_call.1']
    #allocation4 [shape = 's32[1]{0}', space=sflag, size = 0x4, scoped, tag = 'scoped memory for tpu_custom_call.1']
    #allocation5 [shape = 'u8[2048]{0}', space=vmem, size = 0x800, scoped, tag = 'output window, operand 0, single buffered']
    %6 = vsyncpa [#allocation3], 0
    %7 = vsyncpa [#allocation4], 0
    // Predicated region
    $region2: #{tpu_custom_call.1} parent=1 // pred_check
      _
    $region3: #{tpu_custom_call.1} parent=1 // pred_check_branch
      %9 = sbr.rel (0) target = $region5
    $region4: #{tpu_custom_call.1} parent=1 // pred_region
      %s11 = ssub.s32 256, 256
      %12 = vsyncadd [#allocation3], %s11
      %s13 = sshll.u32 [#allocation2], 4
      %s14 = int_to_ptr.vmem [resolvable:$true] %s13
      %19 = dma.hbm_to_vmem [thread:$0]  %s0, 256, %s14, [#allocation3], 128, 128, 8
    $region5: #{tpu_custom_call.1} parent=1 // pred_fallthru
      _
    // Predicated region
    $region6: #{tpu_custom_call.1} parent=1 // pred_check
      _
    $region7: #{tpu_custom_call.1} parent=1 // pred_check_branch
      %21 = sbr.rel (0) target = $region9
    $region8: #{tpu_custom_call.1} parent=1 // pred_region
      %22 = dma.done [#allocation3], 256
    $region9: #{tpu_custom_call.1} parent=1 // pred_fallthru
      _
    %v23 = vld [vmem:[#allocation2] sm:$0xff]
    %v24 = vld [vmem:[#allocation2 + $0x8] sm:$0xff]
    %v27 = vcombine.high %v23, %v23
    %v28 = vcombine.high %v24, %v24
    %vm31 = vcmask 1043456
    %v32 = vsel %vm31, %v23, -inf
    %v33 = vrot.slane %v32, 4
    %v34 = vmax.f32 %v32, %v33
    %v35 = vrot.slane %v34, 2
    %v36 = vmax.f32 %v34, %v35
    %v37 = vrot.slane %v36, 1
    %v38 = vmax.f32 %v36, %v37
    %v39 = vsel %vm31, %v27, -inf
    %v40 = vrot.slane %v39, 4
    %v41 = vmax.f32 %v39, %v40
    %v42 = vrot.slane %v41, 2
    %v43 = vmax.f32 %v41, %v42
    %v44 = vrot.slane %v43, 1
    %v45 = vmax.f32 %v43, %v44
    %v46 = vsel %vm31, %v24, -inf
    %v47 = vrot.slane %v46, 4
    %v48 = vmax.f32 %v46, %v47
    %v49 = vrot.slane %v48, 2
    %v50 = vmax.f32 %v48, %v49
    %v51 = vrot.slane %v50, 1
    %v52 = vmax.f32 %v50, %v51
    %v53 = vsel %vm31, %v28, -inf
    %v54 = vrot.slane %v53, 4
    %v55 = vmax.f32 %v53, %v54
    %v56 = vrot.slane %v55, 2
    %v57 = vmax.f32 %v55, %v56
    %v58 = vrot.slane %v57, 1
    %v59 = vmax.f32 %v57, %v58
    %v64 = vcombine.low %v38, %v45
    %v66 = vunpack.c.l.s4 1983009808
    %v67 = vunpack.c.0.s8 %v66
    %v68 = vlaneseq
    %v69 = vshrl.u32 %v68, 7
    %v70 = vsub.s32 %v67, %v69
    %v71 = vrot.slane %v64, %v70
    %v72 = vcombine.low %v52, %v59
    %v74 = vunpack.c.l.s4 1983009808
    %v75 = vunpack.c.0.s8 %v74
    %v76 = vlaneseq
    %v77 = vshrl.u32 %v76, 7
    %v78 = vsub.s32 %v75, %v77
    %v79 = vrot.slane %v72, %v78
    %vm80 = vcmask 1044484
    %v81 = vsel %vm80, %v71, %v71
    %vm82 = vcmask 1046534
    %v83 = vsel %vm82, %v71, %v81
    %v84 = vrot.slane %v79, 7
    %vm85 = vcmask 1041409
    %v86 = vsel %vm85, %v84, %v83
    %vm87 = vcmask 1043459
    %v88 = vsel %vm87, %v84, %v86
    %vm89 = vcmask 1045509
    %v90 = vsel %vm89, %v84, %v88
    %vm91 = vcmask 1047559
    %v92 = vsel %vm91, %v84, %v90
    %94 = vst [vmem:[#allocation5] sm:$0xf] %v92
    // Predicated region
    $region10: #{tpu_custom_call.1} parent=1 // pred_check
      _
    $region11: #{tpu_custom_call.1} parent=1 // pred_check_branch
      %96 = sbr.rel (0) target = $region13
    $region12: #{tpu_custom_call.1} parent=1 // pred_region
      %s98 = ssub.s32 64, 64
      %99 = vsyncadd [#allocation4], %s98
      %s101 = sshll.u32 [#allocation5], 4
      %s102 = int_to_ptr.vmem [resolvable:$true] %s101
      %104 = dma.vmem_to_hbm [thread:$0]  %s102, 64, %s1, [#allocation4]
    $region13: #{tpu_custom_call.1} parent=1 // pred_fallthru
      _
    // Predicated region
    $region14: #{tpu_custom_call.1} parent=1 // pred_check
      _
    $region15: #{tpu_custom_call.1} parent=1 // pred_check_branch
      %106 = sbr.rel (0) target = $region17
    $region16: #{tpu_custom_call.1} parent=1 // pred_region
      %107 = dma.done [#allocation4], 64
    $region17: #{tpu_custom_call.1} parent=1 // pred_fallthru
      _
    %108 = vsyncpa [#allocation3], 1
    %109 = vsyncpa [#allocation4], 1

</llo_original>
